<compile_context>
chip_gen: v5e
topology: v5e:2x2
jax: 0.10.0
libtpu: 0.0.40
codegen_flags: <defaults>
</compile_context>

<pallas_src>
import functools

import jax
import jax.numpy as jnp
import numpy as np
from jax import lax
from jax.experimental import pallas as pl
from jax.experimental.pallas import tpu as pltpu

_EPS = 1e-5
_VMEM_LIMIT = 32 * 1024 * 1024


# ---------------------------------------------------------------------------
# Kernel A: fused  x@(W1*bn_scale) + shift1 -> ReLU -> @W2 + bias2
# (conv1 3x3/s2 via im2col rows, BN1 folded, then the ConvDPUnit 1x1 conv).
# Rows are pre-folded (fold pixels -> lanes) in the wrapper via block-diagonal
# weights, so the output block is 128-lane dense.
# ---------------------------------------------------------------------------
def _fused_conv1_pw_kernel(x_ref, w1_ref, s1_ref, w2_ref, s2_ref, o_ref):
    h = jnp.dot(x_ref[...], w1_ref[...], preferred_element_type=jnp.float32)
    h = jnp.maximum(h + s1_ref[...], 0.0)
    y = jnp.dot(h.astype(w2_ref.dtype), w2_ref[...],
                preferred_element_type=jnp.float32)
    o_ref[...] = (y + s2_ref[...]).astype(o_ref.dtype)


def fused_conv1_pw(x2d, w1, s1, w2, s2, *, out_dtype=jnp.bfloat16):
    Mf, Kf = x2d.shape
    Cmf = w1.shape[1]
    Cof = w2.shape[1]

    # Row-tile: biggest power-of-two tile that divides Mf (<= 256 folded rows
    # == 1024 output pixels) so the pipeline has double-buffered, VMEM-bounded
    # blocks at realistic image sizes.
    tmf = Mf
    for cand in (256, 128, 64, 32, 16, 8):
        if Mf % cand == 0:
            tmf = cand
            break

    return pl.pallas_call(
        _fused_conv1_pw_kernel,
        out_shape=jax.ShapeDtypeStruct((Mf, Cof), out_dtype),
        grid=(Mf // tmf,),
        in_specs=[
            pl.BlockSpec((tmf, Kf), lambda i: (i, 0)),
            pl.BlockSpec((Kf, Cmf), lambda i: (0, 0)),
            pl.BlockSpec((1, Cmf), lambda i: (0, 0)),
            pl.BlockSpec((Cmf, Cof), lambda i: (0, 0)),
            pl.BlockSpec((1, Cof), lambda i: (0, 0)),
        ],
        out_specs=pl.BlockSpec((tmf, Cof), lambda i: (i, 0)),
        compiler_params=pltpu.CompilerParams(
            dimension_semantics=("parallel",),
            vmem_limit_bytes=_VMEM_LIMIT),
    )(x2d, w1, s1, w2, s2)


# ---------------------------------------------------------------------------
# Kernel B: depthwise 3x3 (stride 1, pad 1) + folded BN affine + ReLU.
# Lane-packed layout: one image row is a (Wo*C,) lane vector. Halo padding is
# done in a VMEM scratch (no padded HBM copy). Three independent accumulators.
# ---------------------------------------------------------------------------
def _dwconv3x3_kernel(x_ref, w_ref, ss_ref, o_ref, pad_ref, *, Ho, Wo, C):
    WoC = Wo * C
    # Zero-fill the padded scratch, then write the interior (upcast to f32).
    pad_ref[...] = jnp.zeros_like(pad_ref)
    pad_ref[1:Ho + 1, C:C + WoC] = x_ref[0].astype(jnp.float32)

    acc = [None, None, None]  # one partial accumulator per kx (breaks add chain)
    for ky in range(3):
        for kx in range(3):
            t = 3 * ky + kx
            term = pad_ref[ky:ky + Ho, kx * C:kx * C + WoC] * w_ref[t:t + 1, :]
            acc[kx] = term if acc[kx] is None else acc[kx] + term
    y = (acc[0] + acc[1]) + acc[2]
    y = y * ss_ref[0:1, :] + ss_ref[1:2, :]
    o_ref[0] = jnp.maximum(y, 0.0)


def dwconv3x3_bn_relu(y2_packed, w_taps, scale, shift, *, Ho, Wo, C):
    """y2_packed: (B, Ho, Wo*C) bf16; w_taps: (9, C); returns (B, Ho, Wo*C) f32."""
    B = y2_packed.shape[0]
    WoC = Wo * C
    w_tiled = jnp.tile(w_taps, (1, Wo)).astype(jnp.float32)            # (9, Wo*C)
    ss = jnp.stack([jnp.tile(scale, Wo),
                    jnp.tile(shift, Wo)]).astype(jnp.float32)          # (2, Wo*C)

    kern = functools.partial(_dwconv3x3_kernel, Ho=Ho, Wo=Wo, C=C)
    # TODO(synk): for very large images, tile over rows with a 1-row halo
    # instead of one whole image per grid step.
    return pl.pallas_call(
        kern,
        out_shape=jax.ShapeDtypeStruct((B, Ho, WoC), jnp.float32),
        grid=(B,),
        in_specs=[
            pl.BlockSpec((1, Ho, WoC), lambda b: (b, 0, 0)),
            pl.BlockSpec((9, WoC), lambda b: (0, 0)),
            pl.BlockSpec((2, WoC), lambda b: (0, 0)),
        ],
        out_specs=pl.BlockSpec((1, Ho, WoC), lambda b: (b, 0, 0)),
        scratch_shapes=[pltpu.VMEM((Ho + 2, (Wo + 2) * C), jnp.float32)],
        compiler_params=pltpu.CompilerParams(
            dimension_semantics=("parallel",),
            vmem_limit_bytes=_VMEM_LIMIT),
    )(y2_packed, w_tiled, ss)


# ---------------------------------------------------------------------------
# Conv_head forward (NCHW in / NCHW out)
# ---------------------------------------------------------------------------
def conv_head_forward(x_nchw, p):
    B, Cin, H, W = x_nchw.shape
    Cmid = p["w1"].shape[0]
    Cout = p["w_dp1"].shape[0]
    Ho = (H + 2 - 3) // 2 + 1
    Wo = (W + 2 - 3) // 2 + 1
    M = B * Ho * Wo
    K = 9 * Cin

    x = jnp.transpose(x_nchw, (0, 2, 3, 1)).astype(jnp.bfloat16)        # NHWC bf16

    # ---- im2col for conv1 (3x3 stride 2 pad 1); K order = (ky, kx, ci)
    # TODO(synk): im2col is still XLA-side glue (done in bf16 to halve its HBM
    # cost); moving it in-kernel via strided VMEM loads would cut it further.
    xp = jnp.pad(x, ((0, 0), (1, 1), (1, 1), (0, 0)))
    patches = [xp[:, ky:ky + 2 * Ho:2, kx:kx + 2 * Wo:2, :]
               for ky in range(3) for kx in range(3)]
    pat2d = jnp.concatenate(patches, axis=-1).reshape(M, K)

    # ---- fold BN1 into conv1 weights; build block-diagonal (pixel-folded)
    # weights so the fused kernel writes 128-lane-dense blocks.
    fold = 1
    if 128 % Cout == 0 and M % (128 // Cout) == 0:
        fold = 128 // Cout

    scale1 = p["gamma1"] * lax.rsqrt(p["var1"] + _EPS)
    shift1 = scale1 * (p["b1"] - p["mean1"]) + p["beta1"]
    w1m = jnp.transpose(p["w1"], (2, 3, 1, 0)).reshape(K, Cmid) * scale1[None, :]
    w2m = p["w_dp1"].reshape(Cout, Cmid).T                              # (Cmid, Cout)

    eye = jnp.eye(fold, dtype=jnp.float32)
    w1_bd = jnp.kron(eye, w1m).astype(jnp.bfloat16)                     # (fold*K, fold*Cmid)
    w2_bd = jnp.kron(eye, w2m).astype(jnp.bfloat16)                     # (fold*Cmid, fold*Cout)
    s1 = jnp.tile(shift1, fold).reshape(1, fold * Cmid).astype(jnp.float32)
    s2 = jnp.tile(p["b_dp1"], fold).reshape(1, fold * Cout).astype(jnp.float32)

    x_fold = pat2d.reshape(M // fold, fold * K)
    y2 = fused_conv1_pw(x_fold, w1_bd, s1, w2_bd, s2)                   # (M//fold, fold*Cout) bf16
    y2 = y2.reshape(B, Ho, Wo * Cout)                                   # lane-packed NHWC (free)

    # ---- ConvDPUnit.conv2: depthwise 3x3 s1 p1 + bn2 + relu (bias into shift)
    scale2 = p["gamma2"] * lax.rsqrt(p["var2"] + _EPS)
    shift2 = p["beta2"] + scale2 * (p["b_dw"] - p["mean2"])
    w_taps = jnp.transpose(p["w_dw"][:, 0], (1, 2, 0)).reshape(9, Cout)  # tap = 3*ky+kx
    y3 = dwconv3x3_bn_relu(y2, w_taps, scale2, shift2, Ho=Ho, Wo=Wo, C=Cout)

    y3 = y3.reshape(B, Ho, Wo, Cout)
    return jnp.transpose(y3, (0, 3, 1, 2))                              # -> NCHW


# ---------------------------------------------------------------------------
# Pure-JAX reference (mirrors the PyTorch forward, BN in eval mode)
# ---------------------------------------------------------------------------
def reference_forward(x, p):
    def conv(x, w, b, stride, pad, groups=1):
        y = lax.conv_general_dilated(
            x, w, (stride, stride), [(pad, pad), (pad, pad)],
            dimension_numbers=("NCHW", "OIHW", "NCHW"),
            feature_group_count=groups)
        return y + b[None, :, None, None]

    def bn(x, g, b, m, v):
        return (g[None, :, None, None] * (x - m[None, :, None, None])
                * lax.rsqrt(v[None, :, None, None] + _EPS) + b[None, :, None, None])

    y = conv(x, p["w1"], p["b1"], 2, 1)
    y = jnp.maximum(bn(y, p["gamma1"], p["beta1"], p["mean1"], p["var1"]), 0.0)
    y = conv(y, p["w_dp1"], p["b_dp1"], 1, 0)
    y = conv(y, p["w_dw"], p["b_dw"], 1, 1, groups=p["w_dw"].shape[0])
    y = jnp.maximum(bn(y, p["gamma2"], p["beta2"], p["mean2"], p["var2"]), 0.0)
    return y


if __name__ == "__main__":
    Cin, Cmid, Cout = 4, 16, 32
    B, H, W = 2, 16, 16

    key = jax.random.PRNGKey(0)
    ks = jax.random.split(key, 14)
    f32 = jnp.float32
    params = dict(
        # Conv_head.conv1 (Cmid, Cin, 3, 3) + bn1
        w1=0.2 * jax.random.normal(ks[0], (Cmid, Cin, 3, 3), f32),
        b1=0.05 * jax.random.normal(ks[1], (Cmid,), f32),
        gamma1=1.0 + 0.1 * jax.random.normal(ks[2], (Cmid,), f32),
        beta1=0.05 * jax.random.normal(ks[3], (Cmid,), f32),
        mean1=0.1 * jax.random.normal(ks[4], (Cmid,), f32),
        var1=jax.random.uniform(ks[5], (Cmid,), f32, 0.5, 1.5),
        # ConvDPUnit.conv1 (1x1) and depthwise conv2 (3x3, groups=Cout) + bn
        w_dp1=0.2 * jax.random.normal(ks[6], (Cout, Cmid, 1, 1), f32),
        b_dp1=0.05 * jax.random.normal(ks[7], (Cout,), f32),
        w_dw=0.2 * jax.random.normal(ks[8], (Cout, 1, 3, 3), f32),
        b_dw=0.05 * jax.random.normal(ks[9], (Cout,), f32),
        gamma2=1.0 + 0.1 * jax.random.normal(ks[10], (Cout,), f32),
        beta2=0.05 * jax.random.normal(ks[11], (Cout,), f32),
        mean2=0.1 * jax.random.normal(ks[12], (Cout,), f32),
        var2=jax.random.uniform(ks[13], (Cout,), f32, 0.5, 1.5),
    )

    x = jax.random.normal(jax.random.fold_in(key, 123), (B, Cin, H, W), f32)

    out = conv_head_forward(x, params)
    out = jax.block_until_ready(out)

    ref = reference_forward(x, params)
    assert out.shape == (B, Cout, H // 2, W // 2), out.shape
    np.testing.assert_allclose(np.asarray(out), np.asarray(ref), rtol=5e-2, atol=5e-2)

    print("KERNEL_OK")
</pallas_src>

<mosaic_0001>
module attributes {stable_mosaic.version = 11 : i64} {
  func.func @_fused_conv1_pw_kernel(%arg0: i32, %arg1: memref<32x144xbf16, #tpu.memory_space<vmem>>, %arg2: memref<144x64xbf16, #tpu.memory_space<vmem>>, %arg3: memref<1x64xf32, #tpu.memory_space<vmem>>, %arg4: memref<64x128xbf16, #tpu.memory_space<vmem>>, %arg5: memref<1x128xf32, #tpu.memory_space<vmem>>, %arg6: memref<32x128xbf16, #tpu.memory_space<vmem>>) attributes {dimension_semantics = [#tpu.dimension_semantics<parallel>], iteration_bounds = array<i64: 1>, scalar_prefetch = 0 : i64, scratch_operands = 0 : i64, tpu.core_type = #tpu.core_type<tc>, window_params = [{transform_indices = @transform_0, window_bounds = array<i64: 32, 144>}, {pipeline_mode = #tpu.pipeline_mode<synchronous>, transform_indices = @transform_1, window_bounds = array<i64: 144, 64>}, {pipeline_mode = #tpu.pipeline_mode<synchronous>, transform_indices = @transform_2, window_bounds = array<i64: 1, 64>}, {pipeline_mode = #tpu.pipeline_mode<synchronous>, transform_indices = @transform_3, window_bounds = array<i64: 64, 128>}, {pipeline_mode = #tpu.pipeline_mode<synchronous>, transform_indices = @transform_4, window_bounds = array<i64: 1, 128>}, {transform_indices = @transform_5, window_bounds = array<i64: 32, 128>}]} {
    %c0 = arith.constant 0 : index
    %c0_0 = arith.constant 0 : index
    %0 = vector.load %arg1[%c0, %c0_0] : memref<32x144xbf16, #tpu.memory_space<vmem>>, vector<32x144xbf16>
    %c0_1 = arith.constant 0 : index
    %c0_2 = arith.constant 0 : index
    %1 = vector.load %arg2[%c0_1, %c0_2] : memref<144x64xbf16, #tpu.memory_space<vmem>>, vector<144x64xbf16>
    %cst = arith.constant dense<0.000000e+00> : vector<32x64xf32>
    %2 = tpu.matmul %0, %1, %cst {dimension_numbers = #tpu.dot_dimension_numbers<[1], [0], [0], [1], [0, 0, 1, 1], [], []>} : vector<32x144xbf16>, vector<144x64xbf16>, vector<32x64xf32> -> vector<32x64xf32>
    %c0_3 = arith.constant 0 : index
    %c0_4 = arith.constant 0 : index
    %3 = vector.load %arg3[%c0_3, %c0_4] : memref<1x64xf32, #tpu.memory_space<vmem>>, vector<1x64xf32>
    %4 = vector.broadcast %3 : vector<1x64xf32> to vector<32x64xf32>
    %5 = arith.addf %2, %4 : vector<32x64xf32>
    %cst_5 = arith.constant 0.000000e+00 : f32
    %6 = vector.broadcast %cst_5 : f32 to vector<32x64xf32>
    %7 = arith.maximumf %5, %6 : vector<32x64xf32>
    %8 = arith.truncf %7 : vector<32x64xf32> to vector<32x64xbf16>
    %c0_6 = arith.constant 0 : index
    %c0_7 = arith.constant 0 : index
    %9 = vector.load %arg4[%c0_6, %c0_7] : memref<64x128xbf16, #tpu.memory_space<vmem>>, vector<64x128xbf16>
    %cst_8 = arith.constant dense<0.000000e+00> : vector<32x128xf32>
    %10 = tpu.matmul %8, %9, %cst_8 {dimension_numbers = #tpu.dot_dimension_numbers<[1], [0], [0], [1], [0, 0, 1, 1], [], []>} : vector<32x64xbf16>, vector<64x128xbf16>, vector<32x128xf32> -> vector<32x128xf32>
    %c0_9 = arith.constant 0 : index
    %c0_10 = arith.constant 0 : index
    %11 = vector.load %arg5[%c0_9, %c0_10] : memref<1x128xf32, #tpu.memory_space<vmem>>, vector<1x128xf32>
    %12 = vector.broadcast %11 : vector<1x128xf32> to vector<32x128xf32>
    %13 = arith.addf %10, %12 : vector<32x128xf32>
    %14 = arith.truncf %13 : vector<32x128xf32> to vector<32x128xbf16>
    %c0_11 = arith.constant 0 : index
    %c0_12 = arith.constant 0 : index
    %15 = vector.load %arg6[%c0_11, %c0_12] : memref<32x128xbf16, #tpu.memory_space<vmem>>, vector<32x128xbf16>
    tpu.vector_store %arg6[%c0_11, %c0_12], %14 {strides = array<i32>} : memref<32x128xbf16, #tpu.memory_space<vmem>>, vector<32x128xbf16>,
    return
  }
  func.func @transform_0(%arg0: i32) -> (i32, i32) {
    %c0_i32 = arith.constant 0 : i32
    %c0_i32_0 = arith.constant 0 : i32
    return %arg0, %c0_i32 : i32, i32
  }
  func.func @transform_1(%arg0: i32) -> (i32, i32) {
    %c0_i32 = arith.constant 0 : i32
    %c0_i32_0 = arith.constant 0 : i32
    %c0_i32_1 = arith.constant 0 : i32
    return %c0_i32, %c0_i32_0 : i32, i32
  }
  func.func @transform_2(%arg0: i32) -> (i32, i32) {
    %c0_i32 = arith.constant 0 : i32
    %c0_i32_0 = arith.constant 0 : i32
    %c0_i32_1 = arith.constant 0 : i32
    return %c0_i32, %c0_i32_0 : i32, i32
  }
  func.func @transform_3(%arg0: i32) -> (i32, i32) {
    %c0_i32 = arith.constant 0 : i32
    %c0_i32_0 = arith.constant 0 : i32
    %c0_i32_1 = arith.constant 0 : i32
    return %c0_i32, %c0_i32_0 : i32, i32
  }
  func.func @transform_4(%arg0: i32) -> (i32, i32) {
    %c0_i32 = arith.constant 0 : i32
    %c0_i32_0 = arith.constant 0 : i32
    %c0_i32_1 = arith.constant 0 : i32
    return %c0_i32, %c0_i32_0 : i32, i32
  }
  func.func @transform_5(%arg0: i32) -> (i32, i32) {
    %c0_i32 = arith.constant 0 : i32
    %c0_i32_0 = arith.constant 0 : i32
    return %arg0, %c0_i32 : i32, i32
  }
}

</mosaic_0001>

<llo_original>
// kernel: tpu_custom_call.1
$region0: #{tpu_custom_call.1}
  #allocation0 [shape = 'u32[]', space=smem, size = 0x4, offset = 0x4, fixed_abs, tag = 'smem constant byte address 0x4 - core index']
  #allocation1 [shape = 'u32[72,128]{1,0:T(1,128)}', space=vmem, size = 0x9000, scoped, tag = 'internal scratch']
  %s0 = inlined_call_operand.vmem [shape: bf16[32,144], index: 0, kind: input, shape index: {}]
  %s1 = inlined_call_operand.vmem [shape: bf16[144,64], index: 1, kind: input, shape index: {}]
  %s2 = inlined_call_operand.vmem [shape: f32[1,64], index: 2, kind: input, shape index: {}]
  %s3 = inlined_call_operand.vmem [shape: bf16[64,128], index: 3, kind: input, shape index: {}]
  %s4 = inlined_call_operand.vmem [shape: f32[1,128], index: 4, kind: input, shape index: {}]
  %s5 = inlined_call_operand.hbm [shape: bf16[32,128], index: 5, kind: output, shape index: {}]
  %s6 = sld [smem:[#allocation0]]
  $region30: #{tpu_custom_call.1} parent=0
    _
  %s8 = ssub.s32 1, %s6
  %s9 = scalar_select 0, %s8, %s6
  $region1: #{tpu_custom_call.1} parent=0
    #allocation2 [shape = 'u8[8192]{0}', space=vmem, size = 0x2000, scoped, tag = 'output window, operand 0, single buffered']
    #allocation3 [shape = 's32[1]{0}', space=sflag, size = 0x4, scoped, tag = 'scoped memory for tpu_custom_call.1']
    %10 = vsyncpa [#allocation3], 0
    // Predicated region
    $region2: #{tpu_custom_call.1} parent=1 // pred_check
      _
    $region3: #{tpu_custom_call.1} parent=1 // pred_check_branch
      %12 = sbr.rel (0) target = $region5
    $region4: #{tpu_custom_call.1} parent=1 // pred_region
      _
    $region5: #{tpu_custom_call.1} parent=1 // pred_fallthru
      _
    // Predicated region
    $region6: #{tpu_custom_call.1} parent=1 // pred_check
      _
    $region7: #{tpu_custom_call.1} parent=1 // pred_check_branch
      %14 = sbr.rel (0) target = $region9
    $region8: #{tpu_custom_call.1} parent=1 // pred_region
      _
    $region9: #{tpu_custom_call.1} parent=1 // pred_fallthru
      _
    // Predicated region
    $region10: #{tpu_custom_call.1} parent=1 // pred_check
      _
    $region11: #{tpu_custom_call.1} parent=1 // pred_check_branch
      %16 = sbr.rel (0) target = $region13
    $region12: #{tpu_custom_call.1} parent=1 // pred_region
      _
    $region13: #{tpu_custom_call.1} parent=1 // pred_fallthru
      _
    // Predicated region
    $region14: #{tpu_custom_call.1} parent=1 // pred_check
      _
    $region15: #{tpu_custom_call.1} parent=1 // pred_check_branch
      %18 = sbr.rel (0) target = $region17
    $region16: #{tpu_custom_call.1} parent=1 // pred_region
      _
    $region17: #{tpu_custom_call.1} parent=1 // pred_fallthru
      _
    // Predicated region
    $region18: #{tpu_custom_call.1} parent=1 // pred_check
      _
    $region19: #{tpu_custom_call.1} parent=1 // pred_check_branch
      %20 = sbr.rel (0) target = $region21
    $region20: #{tpu_custom_call.1} parent=1 // pred_region
      _
    $region21: #{tpu_custom_call.1} parent=1 // pred_fallthru
      _
    %v22 = vld [vmem:[%s0] sm:$0xff]
    %v23 = vld [vmem:[%s0 + $0x8] sm:$0xff]
    %v24 = vld [vmem:[%s0 + $0x10] sm:$0xff]
    %v25 = vld [vmem:[%s0 + $0x18] sm:$0xff]
    %v26 = vld [vmem:[%s1] sm:$0xf]
    %v27 = vld [vmem:[%s1 + $0x4] sm:$0xf]
    %v28 = vld [vmem:[%s1 + $0x8] sm:$0xf]
    %v29 = vld [vmem:[%s1 + $0xc] sm:$0xf]
    %v30 = vld [vmem:[%s1 + $0x10] sm:$0xf]
    %v31 = vld [vmem:[%s1 + $0x14] sm:$0xf]
    %v32 = vld [vmem:[%s1 + $0x18] sm:$0xf]
    %v33 = vld [vmem:[%s1 + $0x1c] sm:$0xf]
    %v34 = vld [vmem:[%s1 + $0x20] sm:$0xf]
    %v35 = vld [vmem:[%s1 + $0x24] sm:$0xf]
    %v36 = vld [vmem:[%s1 + $0x28] sm:$0xf]
    %v37 = vld [vmem:[%s1 + $0x2c] sm:$0xf]
    %v38 = vld [vmem:[%s1 + $0x30] sm:$0xf]
    %v39 = vld [vmem:[%s1 + $0x34] sm:$0xf]
    %v40 = vld [vmem:[%s1 + $0x38] sm:$0xf]
    %v41 = vld [vmem:[%s1 + $0x3c] sm:$0xf]
    %v42 = vld [vmem:[%s1 + $0x40] sm:$0xf]
    %v43 = vld [vmem:[%s1 + $0x44] sm:$0xf]
    %v44 = vld [vmem:[%s2] sm:$0x1]
    %v46 = vperm.slane %v44, 0
    %v52 = vunpack.c.l.b16 %v22
    %v53 = vunpack.c.h.b16 %v22
    %v54 = vunpack.c.l.b16 %v23
    %v55 = vunpack.c.h.b16 %v23
    %v56 = vunpack.c.l.b16 %v24
    %v57 = vunpack.c.h.b16 %v24
    %v58 = vunpack.c.l.b16 %v25
    %v59 = vunpack.c.h.b16 %v25
    %v60 = vpack.c.b16 %v54, %v52
    %v61 = vpack.c.b16 %v55, %v53
    %v62 = vpack.c.b16 %v58, %v56
    %v63 = vpack.c.b16 %v59, %v57
    %v84 = vunpack.c.l.b16 %v26
    %v85 = vunpack.c.l.b16 %v27
    %v86 = vunpack.c.l.b16 %v28
    %v87 = vunpack.c.l.b16 %v29
    %v88 = vunpack.c.l.b16 %v30
    %v89 = vunpack.c.l.b16 %v31
    %v90 = vunpack.c.l.b16 %v32
    %v91 = vunpack.c.l.b16 %v33
    %v92 = vunpack.c.l.b16 %v34
    %v93 = vunpack.c.l.b16 %v35
    %v94 = vunpack.c.l.b16 %v36
    %v95 = vunpack.c.l.b16 %v37
    %v96 = vunpack.c.l.b16 %v38
    %v97 = vunpack.c.l.b16 %v39
    %v98 = vunpack.c.l.b16 %v40
    %v99 = vunpack.c.l.b16 %v41
    %v100 = vunpack.c.l.b16 %v42
    %v101 = vunpack.c.l.b16 %v43
    %v102 = vpack.c.b16 %v85, %v84
    %v103 = vpack.c.b16 %v87, %v86
    %v104 = vpack.c.b16 %v89, %v88
    %v105 = vpack.c.b16 %v91, %v90
    %v106 = vpack.c.b16 %v93, %v92
    %v107 = vpack.c.b16 %v95, %v94
    %v108 = vpack.c.b16 %v97, %v96
    %v109 = vpack.c.b16 %v99, %v98
    %v110 = vpack.c.b16 %v101, %v100
    %vm120 = vcmask 130048
    %v122 = vsel %vm120, %v61, 0
    %v125 = vsel %vm120, %v63, 0
    %127 = vmatpush.bf16.msra.mxu0 %v109
    %128 = vmatpush.bf16.msra.mxu0 %v108
    %129 = vmatpush.bf16.msra.mxu0 %v107
    %130 = vmatpush.bf16.msra.mxu0 %v106
    %131 = vmatpush.bf16.msra.mxu0 %v105
    %132 = vmatpush.bf16.msra.mxu0 %v104
    %133 = vmatpush.bf16.msra.mxu0 %v103
    %134 = vmatpush.bf16.msra.mxu0 %v102
    %135 = vmatmul.bf16.gmra.mxu0 %v60
    %v136 = vpop.f32.mrf.mxu0
    %v137 = vadd.f32 %v46, %v136
    %v138 = vpop.f32.mrf.mxu0
    %v139 = vadd.f32 %v46, %v138
    %140 = vmatmul.bf16.gmra.mxu0 %v62
    %v141 = vpop.f32.mrf.mxu0
    %v142 = vadd.f32 %v46, %v141
    %v143 = vpop.f32.mrf.mxu0
    %v144 = vadd.f32 %v46, %v143
    %145 = vdwg.mxu0
    %146 = vmatpush.bf16.msra.mxu0 0
    %147 = vmatpush.bf16.msra.mxu0 0
    %148 = vmatpush.bf16.msra.mxu0 0
    %149 = vmatpush.bf16.msra.mxu0 0
    %150 = vmatpush.bf16.msra.mxu0 0
    %151 = vmatpush.bf16.msra.mxu0 0
    %152 = vmatpush.bf16.msra.mxu0 0
    %153 = vmatpush.bf16.msra.mxu0 %v110
    %154 = vmatmul.bf16.gmra.mxu0 %v122
    %v155 = vpop.f32.mrf.mxu0
    %v156 = vadd.f32 %v137, %v155
    %v157 = vpop.f32.mrf.mxu0
    %v158 = vadd.f32 %v139, %v157
    %159 = vmatmul.bf16.gmra.mxu0 %v125
    %v160 = vpop.f32.mrf.mxu0
    %v161 = vadd.f32 %v142, %v160
    %v162 = vpop.f32.mrf.mxu0
    %v163 = vadd.f32 %v144, %v162
    %164 = vdwg.mxu0
    %v165 = vmax.f32 %v156, 0.0
    %v166 = vmax.f32 %v158, 0.0
    %v167 = vmax.f32 %v161, 0.0
    %v168 = vmax.f32 %v163, 0.0
    %v169 = vpack.c.bf16 %v166, %v165
    %v170 = vpack.c.bf16 %v168, %v167
    %v171 = vld [vmem:[%s3] sm:$0xf]
    %v172 = vld [vmem:[%s3 + $0x4] sm:$0xf]
    %v173 = vld [vmem:[%s3 + $0x8] sm:$0xf]
    %v174 = vld [vmem:[%s3 + $0xc] sm:$0xf]
    %v175 = vld [vmem:[%s3 + $0x10] sm:$0xf]
    %v176 = vld [vmem:[%s3 + $0x14] sm:$0xf]
    %v177 = vld [vmem:[%s3 + $0x18] sm:$0xf]
    %v178 = vld [vmem:[%s3 + $0x1c] sm:$0xf]
    %v179 = vld [vmem:[%s4] sm:$0x1]
    %v181 = vperm.slane %v179, 0
    %v191 = vunpack.c.l.b16 %v171
    %v192 = vunpack.c.l.b16 %v172
    %v193 = vunpack.c.l.b16 %v173
    %v194 = vunpack.c.l.b16 %v174
    %v195 = vunpack.c.l.b16 %v175
    %v196 = vunpack.c.l.b16 %v176
    %v197 = vunpack.c.l.b16 %v177
    %v198 = vunpack.c.l.b16 %v178
    %v199 = vpack.c.b16 %v192, %v191
    %v200 = vpack.c.b16 %v194, %v193
    %v201 = vpack.c.b16 %v196, %v195
    %v202 = vpack.c.b16 %v198, %v197
    %vm207 = vcmask 523264
    %v209 = vsel %vm207, %v169, 0
    %v212 = vsel %vm207, %v170, 0
    %214 = vmatpush.bf16.msra.mxu0 0
    %215 = vmatpush.bf16.msra.mxu0 0
    %216 = vmatpush.bf16.msra.mxu0 0
    %217 = vmatpush.bf16.msra.mxu0 0
    %218 = vmatpush.bf16.msra.mxu0 %v202
    %219 = vmatpush.bf16.msra.mxu0 %v201
    %220 = vmatpush.bf16.msra.mxu0 %v200
    %221 = vmatpush.bf16.msra.mxu0 %v199
    %222 = vmatmul.bf16.gmra.mxu0 %v209
    %v223 = vpop.f32.mrf.mxu0
    %v224 = vadd.f32 %v181, %v223
    %v225 = vpop.f32.mrf.mxu0
    %v226 = vadd.f32 %v181, %v225
    %227 = vmatmul.bf16.gmra.mxu0 %v212
    %v228 = vpop.f32.mrf.mxu0
    %v229 = vadd.f32 %v181, %v228
    %v230 = vpop.f32.mrf.mxu0
    %v231 = vadd.f32 %v181, %v230
    %232 = vdwg.mxu0
    %v233 = vpack.c.bf16 %v224, %v224
    %v234 = vpack.c.bf16 %v226, %v226
    %v235 = vpack.c.bf16 %v229, %v229
    %v236 = vpack.c.bf16 %v231, %v231
    %237 = vst [vmem:[#allocation2] sm:$0xf] %v233
    %238 = vst [vmem:[#allocation2 + $0x4] sm:$0xf] %v234
    %239 = vst [vmem:[#allocation2 + $0x8] sm:$0xf] %v235
    %240 = vst [vmem:[#allocation2 + $0xc] sm:$0xf] %v236
    // Predicated region
    $region22: #{tpu_custom_call.1} parent=1 // pred_check
      _
    $region23: #{tpu_custom_call.1} parent=1 // pred_check_branch
      %242 = sbr.rel (0) target = $region25
    $region24: #{tpu_custom_call.1} parent=1 // pred_region
      %244 = vsyncadd [#allocation3], 0
      %s245 = sshll.u32 [#allocation2], 4
      %s246 = int_to_ptr.vmem [resolvable:$true] %s245
      %s247 = sshll.u32 %s5, 4
      %s248 = int_to_ptr.hbm [resolvable:$true] %s247
      %253 = dma.vmem_to_hbm [thread:$0]  %s246, 256, %s248, [#allocation3], 64, 64, 4
    $region25: #{tpu_custom_call.1} parent=1 // pred_fallthru
      _
    // Predicated region
    $region26: #{tpu_custom_call.1} parent=1 // pred_check
      _
    $region27: #{tpu_custom_call.1} parent=1 // pred_check_branch
      %255 = sbr.rel (0) target = $region29
    $region28: #{tpu_custom_call.1} parent=1 // pred_region
      %257 = dma.done [#allocation3], 256
    $region29: #{tpu_custom_call.1} parent=1 // pred_fallthru
      _
    %258 = vsyncpa [#allocation3], 1

</llo_original>
